<compile_context>
chip_gen: v6e
topology: v6e:2x2x1
jax: 0.10.0
libtpu: 0.0.40
codegen_flags: <defaults>
</compile_context>

<pallas_src>
import functools

import jax
import jax.numpy as jnp
from jax.experimental import pallas as pl
from jax.experimental.pallas import tpu as pltpu


def _round_up(x: int, m: int) -> int:
    return ((x + m - 1) // m) * m


def _physical_vmem_bytes() -> int:
    """Physical VMEM capacity; conservative 64 MiB fallback (v7x size)."""
    try:
        return int(pltpu.get_tpu_info().vmem_capacity_bytes)
    except Exception:  # non-TPU / query unavailable
        return 64 << 20


def _vmem_bytes(bm, bk, bn, in_p, x_bytes, w_bytes, o_bytes) -> int:
    """Estimated VMEM footprint: double-buffered blocks + f32 acc + margin."""
    return (
        2 * bm * in_p * x_bytes      # x block
        + 2 * bk * in_p * w_bytes    # w_in block (streamed over k)
        + 2 * bn * bk * w_bytes      # w_out block (streamed over j, k)
        + 2 * bm * bn * o_bytes      # out block
        + bm * bn * 4                # f32 accumulator scratch
        + (2 << 20)                  # margin for Mosaic internals
    )


def _mlp_kernel(x_ref, w_in_ref, w_out_ref, o_ref, acc_ref, *, approximate):
    # Grid: (i = batch tile, j = out tile, k = hidden tile), k innermost.
    # x_ref:     (bm, in_p)      resident across j and k (block index (i, 0))
    # w_in_ref:  (bk, in_p)      k-th row-block of w_in   [hidden, in]
    # w_out_ref: (bn, bk)        (j, k) block of w_out    [out, hidden]
    # o_ref:     (bm, bn)
    # acc_ref:   (bm, bn) f32    K-reduction accumulator
    k = pl.program_id(2)

    x = x_ref[...]
    # z_k = x @ w_in_k.T expressed as a (1,1) contraction -> no transpose is
    # materialized; f32 accumulation on the MXU.
    z = jax.lax.dot_general(
        x, w_in_ref[...],
        dimension_numbers=(((1,), (1,)), ((), ())),
        preferred_element_type=jnp.float32,
    )
    if approximate:
        a = jax.nn.gelu(z, approximate=True)           # tanh -> EUP slot
    else:
        # Exact erf GELU (torch.nn.functional.gelu default).
        a = 0.5 * z * (1.0 + jax.lax.erf(z * 0.7071067811865476))
    # Cast the activation back to the operand dtype so bf16 inputs keep both
    # matmuls on the native bf16 MXU path (accumulation stays f32).
    a = a.astype(x.dtype)

    contrib = jax.lax.dot_general(
        a, w_out_ref[...],
        dimension_numbers=(((1,), (1,)), ((), ())),
        preferred_element_type=jnp.float32,
    )

    # First k step writes directly (saves the zero-fill store + add pass).
    @pl.when(k == 0)
    def _():
        acc_ref[...] = contrib

    @pl.when(k > 0)
    def _():
        acc_ref[...] += contrib

    @pl.when(k == pl.num_programs(2) - 1)
    def _():
        o_ref[...] = acc_ref[...].astype(o_ref.dtype)


def _pad2(a, rows, cols):
    pr, pc = rows - a.shape[0], cols - a.shape[1]
    if pr == 0 and pc == 0:      # static check: common aligned case -> no pad
        return a
    return jnp.pad(a, ((0, pr), (0, pc)))


@functools.partial(
    jax.jit,
    static_argnames=("bm", "bk", "bn", "approximate", "vmem_limit"),
)
def _mlp_block_impl(x, w_in, w_out, *, bm, bk, bn, approximate, vmem_limit):
    B, in_f = x.shape
    hidden_f, _ = w_in.shape
    out_f, _ = w_out.shape

    # Pad so every block is lane-dense (128) / sublane-aligned (8).  Zero
    # padding is exact here (gelu(0) == 0, padded weight rows/cols are zero).
    # NOTE: for best performance pad the weights ONCE at parameter-load time;
    # these pads are statically skipped when shapes are already aligned.
    b_p = _round_up(B, bm)
    in_p = _round_up(in_f, 128)
    hid_p = _round_up(hidden_f, bk)
    out_p = _round_up(out_f, bn)

    x_p = _pad2(x, b_p, in_p)
    w_in_p = _pad2(w_in, hid_p, in_p)
    w_out_p = _pad2(w_out, out_p, hid_p)

    nm = b_p // bm
    nn = out_p // bn
    nk = hid_p // bk

    out_padded = pl.pallas_call(
        functools.partial(_mlp_kernel, approximate=approximate),
        out_shape=jax.ShapeDtypeStruct((b_p, out_p), x.dtype),
        grid_spec=pltpu.PrefetchScalarGridSpec(
            num_scalar_prefetch=0,
            grid=(nm, nn, nk),
            in_specs=[
                pl.BlockSpec((bm, in_p), lambda i, j, k: (i, 0)),
                pl.BlockSpec((bk, in_p), lambda i, j, k: (k, 0)),
                pl.BlockSpec((bn, bk), lambda i, j, k: (j, k)),
            ],
            out_specs=pl.BlockSpec((bm, bn), lambda i, j, k: (i, j)),
            scratch_shapes=[pltpu.VMEM((bm, bn), jnp.float32)],
        ),
        compiler_params=pltpu.CompilerParams(
            # i and j are independent -> both "parallel" so v7x's two
            # TensorCores get work even when one of them has a single tile.
            dimension_semantics=("parallel", "parallel", "arbitrary"),
            vmem_limit_bytes=vmem_limit,
        ),
    )(x_p, w_in_p, w_out_p)

    return out_padded[:B, :out_f]


def mlp_block(x, w_in, w_out, *, bm=512, bk=512, bn=None, approximate=False):
    """out = gelu(x @ w_in.T) @ w_out.T   (PyTorch-layout weights).

    Tuning:
      bm: batch tile.  Default 512 on all generations (weights are re-streamed
          once per batch tile, so arithmetic intensity vs weight bytes is
          ~2*bm/itemsize FLOP/byte; 512 clears the v6e/v5e/v7x HBM ridges).
          If VMEM is tight, shrink bk / bn before bm.
      bk: hidden tile (K axis of the second matmul); multiple of 128.
      bn: out-features tile; None = whole (padded) out dim when it fits the
          physical VMEM budget, otherwise auto-halved (multiple of 128).
    """
    B, in_f = x.shape
    hidden_f, in_f2 = w_in.shape
    out_f, hidden_f2 = w_out.shape
    assert in_f == in_f2 and hidden_f == hidden_f2
    assert bm % 8 == 0 and bk % 128 == 0

    in_p = _round_up(in_f, 128)
    hid_p0 = _round_up(hidden_f, 128)
    out_p0 = _round_up(out_f, 128)

    x_bytes = jnp.dtype(x.dtype).itemsize
    w_bytes = jnp.dtype(w_in.dtype).itemsize

    # Clamp tiles to the (padded) problem size.
    bm_eff = min(bm, _round_up(B, 8))
    bk_eff = min(bk, hid_p0)
    bn_eff = out_p0 if bn is None else min(_round_up(bn, 128), out_p0)

    # Auto-shrink against the *physical* VMEM budget (v7x: 64 MiB; v5e/v6e:
    # 128 MiB).  Shrink bn first (adds an output-N axis), then bk, then bm.
    vmem_cap = _physical_vmem_bytes()
    budget = int(0.9 * vmem_cap)

    def fits(bm_, bk_, bn_):
        return _vmem_bytes(bm_, bk_, bn_, in_p, x_bytes, w_bytes, x_bytes) <= budget

    while not fits(bm_eff, bk_eff, bn_eff) and bn_eff > 128:
        bn_eff = max(128, _round_up(bn_eff // 2, 128))
    while not fits(bm_eff, bk_eff, bn_eff) and bk_eff > 128:
        bk_eff = max(128, _round_up(bk_eff // 2, 128))
    while not fits(bm_eff, bk_eff, bn_eff) and bm_eff > 8:
        bm_eff = max(8, _round_up(bm_eff // 2, 8))

    vmem_est = _vmem_bytes(bm_eff, bk_eff, bn_eff, in_p, x_bytes, w_bytes, x_bytes)
    # Honest clamp: never above ~90% of physical VMEM (v7x = 64 MiB) and never
    # above 100 MiB on the 128 MiB generations.
    vmem_limit = int(min(max(vmem_est, 32 << 20), budget, 100 << 20))

    return _mlp_block_impl(
        x, w_in, w_out,
        bm=bm_eff, bk=bk_eff, bn=bn_eff,
        approximate=approximate, vmem_limit=vmem_limit,
    )


def mlp_block_ref(x, w_in, w_out):
    z = x @ w_in.T
    a = jax.nn.gelu(z, approximate=False)
    return a @ w_out.T


if __name__ == "__main__":
    # Small single-shard shapes consistent with the module.
    batch = 16
    in_features = 32
    hidden_features = 64
    out_features = 32

    key = jax.random.PRNGKey(0)
    kx, kwi, kwo = jax.random.split(key, 3)

    x = jax.random.normal(kx, (batch, in_features), dtype=jnp.float32)
    # Parameter init matching the module's __init__ (single-shard):
    #   w_in  ~ randn(hidden, in)  * sqrt(2 / in_features)
    #   w_out ~ randn(out, hidden) * sqrt(2 / hidden_features)
    w_in = jax.random.normal(
        kwi, (hidden_features, in_features), dtype=jnp.float32
    ) * jnp.sqrt(2.0 / in_features)
    w_out = jax.random.normal(
        kwo, (out_features, hidden_features), dtype=jnp.float32
    ) * jnp.sqrt(2.0 / hidden_features)

    ref = mlp_block_ref(x, w_in, w_out)

    # f32 path (exact erf GELU, matches the torch module default).
    out = jax.block_until_ready(mlp_block(x, w_in, w_out))
    assert out.shape == (batch, out_features)
    assert jnp.allclose(out, ref, atol=1e-4, rtol=1e-4), (
        float(jnp.max(jnp.abs(out - ref)))
    )

    # bf16 operands / f32 accumulation (the fast MXU path) -- looser tolerance.
    out_bf16 = jax.block_until_ready(
        mlp_block(
            x.astype(jnp.bfloat16),
            w_in.astype(jnp.bfloat16),
            w_out.astype(jnp.bfloat16),
        )
    )
    assert out_bf16.shape == (batch, out_features)
    assert jnp.allclose(out_bf16.astype(jnp.float32), ref, atol=1e-1, rtol=1e-1), (
        float(jnp.max(jnp.abs(out_bf16.astype(jnp.float32) - ref)))
    )

    print("KERNEL_OK")
</pallas_src>

<mosaic_0001>
module attributes {stable_mosaic.version = 11 : i64} {
  func.func @_mlp_kernel(%arg0: i32, %arg1: i32, %arg2: i32, %arg3: memref<16x128xf32, #tpu.memory_space<vmem>>, %arg4: memref<128x128xf32, #tpu.memory_space<vmem>>, %arg5: memref<128x128xf32, #tpu.memory_space<vmem>>, %arg6: memref<16x128xf32, #tpu.memory_space<vmem>>, %arg7: memref<16x128xf32, #tpu.memory_space<vmem>>) attributes {dimension_semantics = [#tpu.dimension_semantics<parallel>, #tpu.dimension_semantics<parallel>, #tpu.dimension_semantics<arbitrary>], iteration_bounds = array<i64: 1, 1, 1>, scalar_prefetch = 0 : i64, scratch_operands = 1 : i64, tpu.core_type = #tpu.core_type<tc>, window_params = [{transform_indices = @transform_0, window_bounds = array<i64: 16, 128>}, {transform_indices = @transform_1, window_bounds = array<i64: 128, 128>}, {transform_indices = @transform_2, window_bounds = array<i64: 128, 128>}, {transform_indices = @transform_3, window_bounds = array<i64: 16, 128>}]} {
    %c0 = arith.constant 0 : index
    %c0_0 = arith.constant 0 : index
    %0 = vector.load %arg3[%c0, %c0_0] : memref<16x128xf32, #tpu.memory_space<vmem>>, vector<16x128xf32>
    %c0_1 = arith.constant 0 : index
    %c0_2 = arith.constant 0 : index
    %1 = vector.load %arg4[%c0_1, %c0_2] : memref<128x128xf32, #tpu.memory_space<vmem>>, vector<128x128xf32>
    %cst = arith.constant dense<0.000000e+00> : vector<16x128xf32>
    %2 = tpu.matmul %0, %1, %cst {dimension_numbers = #tpu.dot_dimension_numbers<[1], [1], [0], [0], [0, 0, 1, 0], [], []>} : vector<16x128xf32>, vector<128x128xf32>, vector<16x128xf32> -> vector<16x128xf32>
    %cst_3 = arith.constant 5.000000e-01 : f32
    %3 = vector.broadcast %cst_3 : f32 to vector<16x128xf32>
    %4 = arith.mulf %3, %2 : vector<16x128xf32>
    %cst_4 = arith.constant 0.707106769 : f32
    %5 = vector.broadcast %cst_4 : f32 to vector<16x128xf32>
    %6 = arith.mulf %2, %5 : vector<16x128xf32>
    %7 = math.erf %6 : vector<16x128xf32>
    %cst_5 = arith.constant 1.000000e+00 : f32
    %8 = vector.broadcast %cst_5 : f32 to vector<16x128xf32>
    %9 = arith.addf %8, %7 : vector<16x128xf32>
    %10 = arith.mulf %4, %9 : vector<16x128xf32>
    %c0_6 = arith.constant 0 : index
    %c0_7 = arith.constant 0 : index
    %11 = vector.load %arg5[%c0_6, %c0_7] : memref<128x128xf32, #tpu.memory_space<vmem>>, vector<128x128xf32>
    %cst_8 = arith.constant dense<0.000000e+00> : vector<16x128xf32>
    %12 = tpu.matmul %10, %11, %cst_8 {dimension_numbers = #tpu.dot_dimension_numbers<[1], [1], [0], [0], [0, 0, 1, 0], [], []>} : vector<16x128xf32>, vector<128x128xf32>, vector<16x128xf32> -> vector<16x128xf32>
    %c0_i32 = arith.constant 0 : i32
    %13 = arith.cmpi eq, %arg2, %c0_i32 : i32
    %14 = arith.extui %13 : i1 to i32
    %c0_i32_9 = arith.constant 0 : i32
    %15 = arith.cmpi ne, %14, %c0_i32_9 : i32
    scf.if %15 {
      %c0_14 = arith.constant 0 : index
      %c0_15 = arith.constant 0 : index
      %22 = vector.load %arg7[%c0_14, %c0_15] : memref<16x128xf32, #tpu.memory_space<vmem>>, vector<16x128xf32>
      tpu.vector_store %arg7[%c0_14, %c0_15], %12 {strides = array<i32>} : memref<16x128xf32, #tpu.memory_space<vmem>>, vector<16x128xf32>,
    } else {
    }
    %c0_i32_10 = arith.constant 0 : i32
    %16 = arith.cmpi sgt, %arg2, %c0_i32_10 : i32
    %17 = arith.extui %16 : i1 to i32
    %c0_i32_11 = arith.constant 0 : i32
    %18 = arith.cmpi ne, %17, %c0_i32_11 : i32
    scf.if %18 {
      %c0_14 = arith.constant 0 : index
      %c0_15 = arith.constant 0 : index
      %22 = vector.load %arg7[%c0_14, %c0_15] : memref<16x128xf32, #tpu.memory_space<vmem>>, vector<16x128xf32>
      %23 = arith.addf %22, %12 : vector<16x128xf32>
      %c0_16 = arith.constant 0 : index
      %c0_17 = arith.constant 0 : index
      %24 = vector.load %arg7[%c0_16, %c0_17] : memref<16x128xf32, #tpu.memory_space<vmem>>, vector<16x128xf32>
      tpu.vector_store %arg7[%c0_16, %c0_17], %23 {strides = array<i32>} : memref<16x128xf32, #tpu.memory_space<vmem>>, vector<16x128xf32>,
    } else {
    }
    %c0_i32_12 = arith.constant 0 : i32
    %19 = arith.cmpi eq, %arg2, %c0_i32_12 : i32
    %20 = arith.extui %19 : i1 to i32
    %c0_i32_13 = arith.constant 0 : i32
    %21 = arith.cmpi ne, %20, %c0_i32_13 : i32
    scf.if %21 {
      %c0_14 = arith.constant 0 : index
      %c0_15 = arith.constant 0 : index
      %22 = vector.load %arg7[%c0_14, %c0_15] : memref<16x128xf32, #tpu.memory_space<vmem>>, vector<16x128xf32>
      %c0_16 = arith.constant 0 : index
      %c0_17 = arith.constant 0 : index
      %23 = vector.load %arg6[%c0_16, %c0_17] : memref<16x128xf32, #tpu.memory_space<vmem>>, vector<16x128xf32>
      tpu.vector_store %arg6[%c0_16, %c0_17], %22 {strides = array<i32>} : memref<16x128xf32, #tpu.memory_space<vmem>>, vector<16x128xf32>,
    } else {
    }
    return
  }
  func.func @transform_0(%arg0: i32, %arg1: i32, %arg2: i32) -> (i32, i32) {
    %c0_i32 = arith.constant 0 : i32
    %c0_i32_0 = arith.constant 0 : i32
    return %arg0, %c0_i32 : i32, i32
  }
  func.func @transform_1(%arg0: i32, %arg1: i32, %arg2: i32) -> (i32, i32) {
    %c0_i32 = arith.constant 0 : i32
    %c0_i32_0 = arith.constant 0 : i32
    return %arg2, %c0_i32 : i32, i32
  }
  func.func @transform_2(%arg0: i32, %arg1: i32, %arg2: i32) -> (i32, i32) {
    %c0_i32 = arith.constant 0 : i32
    return %arg1, %arg2 : i32, i32
  }
  func.func @transform_3(%arg0: i32, %arg1: i32, %arg2: i32) -> (i32, i32) {
    %c0_i32 = arith.constant 0 : i32
    return %arg0, %arg1 : i32, i32
  }
}

</mosaic_0001>

<llo_original>
// kernel: _mlp_block_impl.1
$region0: #{_mlp_block_impl.1}
  #allocation0 [shape = 'u32[]', space=smem, size = 0x4, offset = 0x4, fixed_abs, tag = 'smem constant byte address 0x4 - core index']
  #allocation1 [shape = 'u32[144,128]{1,0:T(1,128)}', space=vmem, size = 0x12000, scoped, tag = 'internal scratch']
  #allocation2 [shape = 'f32[16,128]{1,0:T(8,128)}', space=vmem, size = 0x2000, scoped, tag = 'scratch operand']
  %s0 = inlined_call_operand.vmem [shape: f32[16,128], index: 0, kind: input, shape index: {}]
  %s1 = inlined_call_operand.vmem [shape: f32[128,128], index: 1, kind: input, shape index: {}]
  %s2 = inlined_call_operand.vmem [shape: f32[128,128], index: 2, kind: input, shape index: {}]
  %s3 = inlined_call_operand.hbm [shape: f32[16,128], index: 3, kind: output, shape index: {}]
  %s4 = sld [smem:[#allocation0]]
  $region34: #{_mlp_block_impl.1} parent=0
    _
  %s6 = ssub.s32 1, %s4
  %s7 = scalar_select 0, %s6, %s4
  $region1: #{_mlp_block_impl.1} parent=0
    #allocation3 [shape = 'u8[8192]{0}', space=vmem, size = 0x2000, scoped, tag = 'output window, operand 0, single buffered']
    #allocation4 [shape = 's32[1]{0}', space=sflag, size = 0x4, scoped, tag = 'scoped memory for _mlp_block_impl.1']
    %8 = vsyncpa [#allocation4], 0
    // Predicated region
    $region2: #{_mlp_block_impl.1} parent=1 // pred_check
      _
    $region3: #{_mlp_block_impl.1} parent=1 // pred_check_branch
      %10 = sbr.rel (0) target = $region5
    $region4: #{_mlp_block_impl.1} parent=1 // pred_region
      _
    $region5: #{_mlp_block_impl.1} parent=1 // pred_fallthru
      _
    // Predicated region
    $region6: #{_mlp_block_impl.1} parent=1 // pred_check
      _
    $region7: #{_mlp_block_impl.1} parent=1 // pred_check_branch
      %12 = sbr.rel (0) target = $region9
    $region8: #{_mlp_block_impl.1} parent=1 // pred_region
      _
    $region9: #{_mlp_block_impl.1} parent=1 // pred_fallthru
      _
    // Predicated region
    $region10: #{_mlp_block_impl.1} parent=1 // pred_check
      _
    $region11: #{_mlp_block_impl.1} parent=1 // pred_check_branch
      %14 = sbr.rel (0) target = $region13
    $region12: #{_mlp_block_impl.1} parent=1 // pred_region
      _
    $region13: #{_mlp_block_impl.1} parent=1 // pred_fallthru
      _
    %v15 = vld [vmem:[%s0] sm:$0xff]
    %v16 = vld [vmem:[%s0 + $0x8] sm:$0xff]
    %v17 = vld [vmem:[%s1] sm:$0xff]
    %v18 = vld [vmem:[%s1 + $0x8] sm:$0xff]
    %v19 = vld [vmem:[%s1 + $0x10] sm:$0xff]
    %v20 = vld [vmem:[%s1 + $0x18] sm:$0xff]
    %v21 = vld [vmem:[%s1 + $0x20] sm:$0xff]
    %v22 = vld [vmem:[%s1 + $0x28] sm:$0xff]
    %v23 = vld [vmem:[%s1 + $0x30] sm:$0xff]
    %v24 = vld [vmem:[%s1 + $0x38] sm:$0xff]
    %v25 = vld [vmem:[%s1 + $0x40] sm:$0xff]
    %v26 = vld [vmem:[%s1 + $0x48] sm:$0xff]
    %v27 = vld [vmem:[%s1 + $0x50] sm:$0xff]
    %v28 = vld [vmem:[%s1 + $0x58] sm:$0xff]
    %v29 = vld [vmem:[%s1 + $0x60] sm:$0xff]
    %v30 = vld [vmem:[%s1 + $0x68] sm:$0xff]
    %v31 = vld [vmem:[%s1 + $0x70] sm:$0xff]
    %v32 = vld [vmem:[%s1 + $0x78] sm:$0xff]
    %33 = vmatprep.subr.mxu0 0.0
    %34 = vmatpush1.xpose.msra.mxu0 %v32
    %35 = vmatprep.subr.mxu0 0.0
    %36 = vmatpush1.xpose.msra.mxu0 %v31
    %37 = vmatprep.subr.mxu0 0.0
    %38 = vmatpush1.xpose.msra.mxu0 %v30
    %39 = vmatprep.subr.mxu0 0.0
    %40 = vmatpush1.xpose.msra.mxu0 %v29
    %41 = vmatprep.subr.mxu0 0.0
    %42 = vmatpush1.xpose.msra.mxu0 %v28
    %43 = vmatprep.subr.mxu0 0.0
    %44 = vmatpush1.xpose.msra.mxu0 %v27
    %45 = vmatprep.subr.mxu0 0.0
    %46 = vmatpush1.xpose.msra.mxu0 %v26
    %47 = vmatprep.subr.mxu0 0.0
    %48 = vmatpush1.xpose.msra.mxu0 %v25
    %49 = vmatprep.subr.mxu0 0.0
    %50 = vmatpush1.xpose.msra.mxu0 %v24
    %51 = vmatprep.subr.mxu0 0.0
    %52 = vmatpush1.xpose.msra.mxu0 %v23
    %53 = vmatprep.subr.mxu0 0.0
    %54 = vmatpush1.xpose.msra.mxu0 %v22
    %55 = vmatprep.subr.mxu0 0.0
    %56 = vmatpush1.xpose.msra.mxu0 %v21
    %57 = vmatprep.subr.mxu0 0.0
    %58 = vmatpush1.xpose.msra.mxu0 %v20
    %59 = vmatprep.subr.mxu0 0.0
    %60 = vmatpush1.xpose.msra.mxu0 %v19
    %61 = vmatprep.subr.mxu0 0.0
    %62 = vmatpush1.xpose.msra.mxu0 %v18
    %63 = vmatprep.subr.mxu0 0.0
    %64 = vmatpush1.xpose.msra.mxu0 %v17
    %65 = vmatprep.subr.mxu0 0.0
    %66 = vmatpush2.xpose.msra.mxu0 0.0
    %67 = vmatprep.subr.mxu0 0.0
    %68 = vmatpush2.xpose.msra.mxu0 0.0
    %69 = vmatprep.subr.mxu0 0.0
    %70 = vmatpush2.xpose.msra.mxu0 0.0
    %71 = vmatprep.subr.mxu0 0.0
    %72 = vmatpush2.xpose.msra.mxu0 0.0
    %73 = vmatprep.subr.mxu0 0.0
    %74 = vmatpush2.xpose.msra.mxu0 0.0
    %75 = vmatprep.subr.mxu0 0.0
    %76 = vmatpush2.xpose.msra.mxu0 0.0
    %77 = vmatprep.subr.mxu0 0.0
    %78 = vmatpush2.xpose.msra.mxu0 0.0
    %79 = vmatprep.subr.mxu0 0.0
    %80 = vmatpush2.xpose.msra.mxu0 0.0
    %81 = vmatprep.subr.mxu0 0.0
    %82 = vmatpush2.xpose.msra.mxu0 0.0
    %83 = vmatprep.subr.mxu0 0.0
    %84 = vmatpush2.xpose.msra.mxu0 0.0
    %85 = vmatprep.subr.mxu0 0.0
    %86 = vmatpush2.xpose.msra.mxu0 0.0
    %87 = vmatprep.subr.mxu0 0.0
    %88 = vmatpush2.xpose.msra.mxu0 0.0
    %89 = vmatprep.subr.mxu0 0.0
    %90 = vmatpush2.xpose.msra.mxu0 0.0
    %91 = vmatprep.subr.mxu0 0.0
    %92 = vmatpush2.xpose.msra.mxu0 0.0
    %93 = vmatprep.subr.mxu0 0.0
    %94 = vmatpush2.xpose.msra.mxu0 0.0
    %95 = vmatprep.subr.mxu0 0.0
    %96 = vmatpush2.xpose.msra.mxu0 0.0
    %97 = vmatprep.mubr.f32.mxu0 0.0
    %98 = vmatmul.mubr.f32.gmra.mxu0 %v15
    %v99 = vpop.f32.mrf.mxu0
    %v100 = vadd.f32 0.0, %v99
    %v101 = vpop.f32.mrf.mxu0
    %102 = vmatprep.mubr.f32.mxu0 0.0
    %103 = vmatmul.mubr.f32.gmra.mxu0 %v16
    %v104 = vpop.f32.mrf.mxu0
    %v105 = vadd.f32 0.0, %v104
    %v106 = vpop.f32.mrf.mxu0
    %107 = vdwg.mxu0
    %v108 = vmul.f32 %v100, 0.5
    %v109 = vmul.f32 %v105, 0.5
    %v110 = vmul.f32 %v100, 0.70710677
    %v111 = vmul.f32 %v105, 0.70710677
    %v112 = verf.f32.pop %v110
    %v113 = verf.f32.pop %v111
    %v114 = vadd.f32 %v112, 1.0
    %v115 = vadd.f32 %v113, 1.0
    %v116 = vmul.f32 %v108, %v114
    %v117 = vmul.f32 %v109, %v115
    %v118 = vld [vmem:[%s2] sm:$0xff]
    %v119 = vld [vmem:[%s2 + $0x8] sm:$0xff]
    %v120 = vld [vmem:[%s2 + $0x10] sm:$0xff]
    %v121 = vld [vmem:[%s2 + $0x18] sm:$0xff]
    %v122 = vld [vmem:[%s2 + $0x20] sm:$0xff]
    %v123 = vld [vmem:[%s2 + $0x28] sm:$0xff]
    %v124 = vld [vmem:[%s2 + $0x30] sm:$0xff]
    %v125 = vld [vmem:[%s2 + $0x38] sm:$0xff]
    %v126 = vld [vmem:[%s2 + $0x40] sm:$0xff]
    %v127 = vld [vmem:[%s2 + $0x48] sm:$0xff]
    %v128 = vld [vmem:[%s2 + $0x50] sm:$0xff]
    %v129 = vld [vmem:[%s2 + $0x58] sm:$0xff]
    %v130 = vld [vmem:[%s2 + $0x60] sm:$0xff]
    %v131 = vld [vmem:[%s2 + $0x68] sm:$0xff]
    %v132 = vld [vmem:[%s2 + $0x70] sm:$0xff]
    %v133 = vld [vmem:[%s2 + $0x78] sm:$0xff]
    %134 = vmatprep.subr.mxu0 0.0
    %135 = vmatpush1.xpose.msra.mxu0 %v133
    %136 = vmatprep.subr.mxu0 0.0
    %137 = vmatpush1.xpose.msra.mxu0 %v132
    %138 = vmatprep.subr.mxu0 0.0
    %139 = vmatpush1.xpose.msra.mxu0 %v131
    %140 = vmatprep.subr.mxu0 0.0
    %141 = vmatpush1.xpose.msra.mxu0 %v130
    %142 = vmatprep.subr.mxu0 0.0
    %143 = vmatpush1.xpose.msra.mxu0 %v129
    %144 = vmatprep.subr.mxu0 0.0
    %145 = vmatpush1.xpose.msra.mxu0 %v128
    %146 = vmatprep.subr.mxu0 0.0
    %147 = vmatpush1.xpose.msra.mxu0 %v127
    %148 = vmatprep.subr.mxu0 0.0
    %149 = vmatpush1.xpose.msra.mxu0 %v126
    %150 = vmatprep.subr.mxu0 0.0
    %151 = vmatpush1.xpose.msra.mxu0 %v125
    %152 = vmatprep.subr.mxu0 0.0
    %153 = vmatpush1.xpose.msra.mxu0 %v124
    %154 = vmatprep.subr.mxu0 0.0
    %155 = vmatpush1.xpose.msra.mxu0 %v123
    %156 = vmatprep.subr.mxu0 0.0
    %157 = vmatpush1.xpose.msra.mxu0 %v122
    %158 = vmatprep.subr.mxu0 0.0
    %159 = vmatpush1.xpose.msra.mxu0 %v121
    %160 = vmatprep.subr.mxu0 0.0
    %161 = vmatpush1.xpose.msra.mxu0 %v120
    %162 = vmatprep.subr.mxu0 0.0
    %163 = vmatpush1.xpose.msra.mxu0 %v119
    %164 = vmatprep.subr.mxu0 0.0
    %165 = vmatpush1.xpose.msra.mxu0 %v118
    %166 = vmatprep.subr.mxu0 0.0
    %167 = vmatpush2.xpose.msra.mxu0 0.0
    %168 = vmatprep.subr.mxu0 0.0
    %169 = vmatpush2.xpose.msra.mxu0 0.0
    %170 = vmatprep.subr.mxu0 0.0
    %171 = vmatpush2.xpose.msra.mxu0 0.0
    %172 = vmatprep.subr.mxu0 0.0
    %173 = vmatpush2.xpose.msra.mxu0 0.0
    %174 = vmatprep.subr.mxu0 0.0
    %175 = vmatpush2.xpose.msra.mxu0 0.0
    %176 = vmatprep.subr.mxu0 0.0
    %177 = vmatpush2.xpose.msra.mxu0 0.0
    %178 = vmatprep.subr.mxu0 0.0
    %179 = vmatpush2.xpose.msra.mxu0 0.0
    %180 = vmatprep.subr.mxu0 0.0
    %181 = vmatpush2.xpose.msra.mxu0 0.0
    %182 = vmatprep.subr.mxu0 0.0
    %183 = vmatpush2.xpose.msra.mxu0 0.0
    %184 = vmatprep.subr.mxu0 0.0
    %185 = vmatpush2.xpose.msra.mxu0 0.0
    %186 = vmatprep.subr.mxu0 0.0
    %187 = vmatpush2.xpose.msra.mxu0 0.0
    %188 = vmatprep.subr.mxu0 0.0
    %189 = vmatpush2.xpose.msra.mxu0 0.0
    %190 = vmatprep.subr.mxu0 0.0
    %191 = vmatpush2.xpose.msra.mxu0 0.0
    %192 = vmatprep.subr.mxu0 0.0
    %193 = vmatpush2.xpose.msra.mxu0 0.0
    %194 = vmatprep.subr.mxu0 0.0
    %195 = vmatpush2.xpose.msra.mxu0 0.0
    %196 = vmatprep.subr.mxu0 0.0
    %197 = vmatpush2.xpose.msra.mxu0 0.0
    %198 = vmatprep.mubr.f32.mxu0 0.0
    %199 = vmatmul.mubr.f32.gmra.mxu0 %v116
    %v200 = vpop.f32.mrf.mxu0
    %v201 = vadd.f32 0.0, %v200
    %v202 = vpop.f32.mrf.mxu0
    %203 = vmatprep.mubr.f32.mxu0 0.0
    %204 = vmatmul.mubr.f32.gmra.mxu0 %v117
    %v205 = vpop.f32.mrf.mxu0
    %v206 = vadd.f32 0.0, %v205
    %v207 = vpop.f32.mrf.mxu0
    %208 = vdwg.mxu0
    %p209 = scmp.eq.s32.totalorder 0, 0
    // Predicated region
    $region14: #{_mlp_block_impl.1} parent=1 // pred_check
      %p210 = pneg %p209
    $region15: #{_mlp_block_impl.1} parent=1 // pred_check_branch
      %212 = sbr.rel (%p210) target = $region17
    $region16: #{_mlp_block_impl.1} parent=1 // pred_region
      %213 = vst [vmem:[#allocation2] sm:$0xff] %v201
      %214 = vst [vmem:[#allocation2 + $0x8] sm:$0xff] %v206
    $region17: #{_mlp_block_impl.1} parent=1 // pred_fallthru
      _
    %p215 = scmp.gt.s32.totalorder 0, 0
    // Predicated region
    $region18: #{_mlp_block_impl.1} parent=1 // pred_check
      %p216 = pneg %p215
    $region19: #{_mlp_block_impl.1} parent=1 // pred_check_branch
      %218 = sbr.rel (%p216) target = $region21
    $region20: #{_mlp_block_impl.1} parent=1 // pred_region
      %v219 = vld [vmem:[#allocation2] sm:$0xff]
      %v220 = vld [vmem:[#allocation2 + $0x8] sm:$0xff]
      %v221 = vadd.f32 %v219, %v201
      %v222 = vadd.f32 %v220, %v206
      %223 = vst [vmem:[#allocation2] sm:$0xff] %v221
      %224 = vst [vmem:[#allocation2 + $0x8] sm:$0xff] %v222
    $region21: #{_mlp_block_impl.1} parent=1 // pred_fallthru
      _
    // Predicated region
    $region22: #{_mlp_block_impl.1} parent=1 // pred_check
      %p225 = pneg %p209
    $region23: #{_mlp_block_impl.1} parent=1 // pred_check_branch
      %227 = sbr.rel (%p225) target = $region25
    $region24: #{_mlp_block_impl.1} parent=1 // pred_region
      %v228 = vld [vmem:[#allocation2] sm:$0xff]
      %v229 = vld [vmem:[#allocation2 + $0x8] sm:$0xff]
      %230 = vst [vmem:[#allocation3] sm:$0xff] %v228
      %231 = vst [vmem:[#allocation3 + $0x8] sm:$0xff] %v229
    $region25: #{_mlp_block_impl.1} parent=1 // pred_fallthru
      _
    // Predicated region
    $region26: #{_mlp_block_impl.1} parent=1 // pred_check
      _
    $region27: #{_mlp_block_impl.1} parent=1 // pred_check_branch
      %233 = sbr.rel (0) target = $region29
    $region28: #{_mlp_block_impl.1} parent=1 // pred_region
      %s235 = ssub.s32 256, 256
      %236 = vsyncadd [#allocation4], %s235
      %s237 = sshll.u32 [#allocation3], 4
      %s238 = int_to_ptr.vmem [resolvable:$true] %s237
      %243 = dma.vmem_to_hbm [thread:$0]  %s238, 256, %s3, [#allocation4], 128, 128, 8
    $region29: #{_mlp_block_impl.1} parent=1 // pred_fallthru
      _
    // Predicated region
    $region30: #{_mlp_block_impl.1} parent=1 // pred_check
      _
    $region31: #{_mlp_block_impl.1} parent=1 // pred_check_branch
      %245 = sbr.rel (0) target = $region33
    $region32: #{_mlp_block_impl.1} parent=1 // pred_region
      %246 = dma.done [#allocation4], 256
    $region33: #{_mlp_block_impl.1} parent=1 // pred_fallthru
      _
    %247 = vsyncpa [#allocation4], 1

</llo_original>
